<compile_context>
chip_gen: v7x
topology: tpu7x:2x2x1
jax: 0.10.0
libtpu: 0.0.40
codegen_flags: <defaults>
</compile_context>

<pallas_src>
import jax
import jax.numpy as jnp
from jax import lax
from jax.experimental import pallas as pl
from jax.experimental.pallas import tpu as pltpu


def _plain_head_score_kernel(x_ref, w_ref, b_ref, out_ref):
    # x_ref   : (1, C, HW) VMEM block -- one batch element, lane-dense
    # w_ref   : (C, 1)     VMEM       -- 1x1 scoring-conv weights (one per channel)
    # b_ref   : (1,)       SMEM       -- scoring-conv bias
    # out_ref : (1, 1, HW) VMEM       -- |score| row for this batch element
    xb = x_ref[0]                                           # (C, HW)
    s = jnp.sum(xb * w_ref[...], axis=0, keepdims=True)     # (1, HW), sublane reduce
    out_ref[0] = jnp.abs(s + b_ref[0])


def plain_head_forward(x, w_scoring, b_scoring, *, topk_rate=0.1):
    """PlainHead.forward: 1x1 scoring conv -> |.| -> top-k -> mean -> (B, 1)."""
    B, C, H, W = x.shape
    HW = H * W
    k = max(int(HW * topk_rate), 1)

    x_flat = x.reshape(B, C, HW).astype(jnp.float32)
    w = w_scoring.reshape(C, 1).astype(jnp.float32)   # Conv2d(C, 1, 1) weight (1,C,1,1)
    b = b_scoring.reshape(1).astype(jnp.float32)

    scores = pl.pallas_call(
        _plain_head_score_kernel,
        out_shape=jax.ShapeDtypeStruct((B, 1, HW), jnp.float32),
        grid=(B,),
        in_specs=[
            pl.BlockSpec((1, C, HW), lambda bb: (bb, 0, 0)),        # x[b]
            pl.BlockSpec((C, 1), lambda bb: (0, 0)),                # scoring weights
            pl.BlockSpec(memory_space=pltpu.MemorySpace.SMEM),      # scoring bias
        ],
        out_specs=pl.BlockSpec((1, 1, HW), lambda bb: (bb, 0, 0)),  # lane-dense row
        compiler_params=pltpu.CompilerParams(dimension_semantics=("parallel",)),
    )(x_flat, w, b)

    scores = scores.reshape(B, HW)
    # TODO(synk): torch.topk has no Pallas/Mosaic primitive; per the perf review
    # (option A) the k-selection + mean run as plain XLA here instead of a
    # K-step serial cross-lane reduction chain inside the kernel.
    top = lax.top_k(scores, k)[0]
    return jnp.mean(top, axis=1, keepdims=True)


def _reference_forward(x, w_scoring, b_scoring, *, topk_rate=0.1):
    """Pure-JAX reference mirroring the PyTorch PlainHead forward."""
    B, C, H, W = x.shape
    s = jnp.einsum("bchw,c->bhw", x, w_scoring.reshape(C)) + b_scoring.reshape(())
    flat = jnp.abs(s.reshape(B, -1))
    k = max(int(flat.shape[1] * topk_rate), 1)
    top = lax.top_k(flat, k)[0]
    return jnp.mean(top, axis=1).reshape(-1, 1)


if __name__ == "__main__":
    B, C, H, W = 2, 4, 16, 16     # x: (B, C, H, W)

    key = jax.random.PRNGKey(0)
    kx, kw, kb = jax.random.split(key, 3)
    x = jax.random.normal(kx, (B, C, H, W), jnp.float32)
    # parameters follow nn.Conv2d(in_dim, 1, kernel_size=1): weight (1,C,1,1), bias (1,)
    w_scoring = 0.1 * jax.random.normal(kw, (1, C, 1, 1), jnp.float32)
    b_scoring = 0.1 * jax.random.normal(kb, (1,), jnp.float32)

    out = plain_head_forward(x, w_scoring, b_scoring)
    out = jax.block_until_ready(out)

    expected = _reference_forward(x, w_scoring, b_scoring)
    assert out.shape == (B, 1)
    assert jnp.allclose(out, expected, atol=1e-4, rtol=1e-4), (out, expected)
    print("KERNEL_OK")
</pallas_src>

<mosaic_0001>
module attributes {stable_mosaic.version = 11 : i64} {
  func.func @_plain_head_score_kernel(%arg0: i32, %arg1: memref<1x4x256xf32, #tpu.memory_space<vmem>>, %arg2: memref<4x1xf32, #tpu.memory_space<vmem>>, %arg3: memref<1xf32, #tpu.memory_space<smem>>, %arg4: memref<1x1x256xf32, #tpu.memory_space<vmem>>) attributes {dimension_semantics = [#tpu.dimension_semantics<parallel>], iteration_bounds = array<i64: 2>, scalar_prefetch = 0 : i64, scratch_operands = 0 : i64, tpu.core_type = #tpu.core_type<tc>, window_params = [{transform_indices = @transform_0, window_bounds = array<i64: 1, 4, 256>}, {pipeline_mode = #tpu.pipeline_mode<synchronous>, transform_indices = @transform_1, window_bounds = array<i64: 4, 1>}, {transform_indices = @transform_2, window_bounds = array<i64: 1>}, {transform_indices = @transform_3, window_bounds = array<i64: 1, 1, 256>}]} {
    %c0 = arith.constant 0 : index
    %c0_0 = arith.constant 0 : index
    %c0_1 = arith.constant 0 : index
    %0 = vector.load %arg1[%c0, %c0_0, %c0_1] : memref<1x4x256xf32, #tpu.memory_space<vmem>>, vector<1x4x256xf32>
    %1 = vector.shape_cast %0 : vector<1x4x256xf32> to vector<4x256xf32>
    %c0_2 = arith.constant 0 : index
    %c0_3 = arith.constant 0 : index
    %2 = vector.load %arg2[%c0_2, %c0_3] : memref<4x1xf32, #tpu.memory_space<vmem>>, vector<4x1xf32>
    %3 = vector.broadcast %2 : vector<4x1xf32> to vector<4x256xf32>
    %4 = arith.mulf %1, %3 : vector<4x256xf32>
    %cst = arith.constant dense<0.000000e+00> : vector<256xf32>
    %5 = vector.multi_reduction <add>, %4, %cst [0] : vector<4x256xf32> to vector<256xf32>
    %6 = vector.shape_cast %5 : vector<256xf32> to vector<1x256xf32>
    %c0_4 = arith.constant 0 : index
    %7 = memref.load %arg3[%c0_4] : memref<1xf32, #tpu.memory_space<smem>>
    %8 = vector.broadcast %7 : f32 to vector<1x256xf32>
    %9 = arith.addf %6, %8 : vector<1x256xf32>
    %10 = math.absf %9 : vector<1x256xf32>
    %c0_5 = arith.constant 0 : index
    %c0_6 = arith.constant 0 : index
    %c0_7 = arith.constant 0 : index
    %11 = vector.load %arg4[%c0_5, %c0_6, %c0_7] : memref<1x1x256xf32, #tpu.memory_space<vmem>>, vector<1x1x256xf32>
    %12 = vector.shape_cast %11 : vector<1x1x256xf32> to vector<1x256xf32>
    %13 = vector.shape_cast %10 : vector<1x256xf32> to vector<1x1x256xf32>
    tpu.vector_store %arg4[%c0_5, %c0_6, %c0_7], %13 {strides = array<i32>} : memref<1x1x256xf32, #tpu.memory_space<vmem>>, vector<1x1x256xf32>,
    return
  }
  func.func @transform_0(%arg0: i32) -> (i32, i32, i32) {
    %c0_i32 = arith.constant 0 : i32
    %c0_i32_0 = arith.constant 0 : i32
    %c0_i32_1 = arith.constant 0 : i32
    return %arg0, %c0_i32, %c0_i32_0 : i32, i32, i32
  }
  func.func @transform_1(%arg0: i32) -> (i32, i32) {
    %c0_i32 = arith.constant 0 : i32
    %c0_i32_0 = arith.constant 0 : i32
    %c0_i32_1 = arith.constant 0 : i32
    return %c0_i32, %c0_i32_0 : i32, i32
  }
  func.func @transform_2(%arg0: i32) -> i32 {
    %c0_i32 = arith.constant 0 : i32
    %c0_i32_0 = arith.constant 0 : i32
    return %c0_i32 : i32
  }
  func.func @transform_3(%arg0: i32) -> (i32, i32, i32) {
    %c0_i32 = arith.constant 0 : i32
    %c0_i32_0 = arith.constant 0 : i32
    %c0_i32_1 = arith.constant 0 : i32
    return %arg0, %c0_i32, %c0_i32_0 : i32, i32, i32
  }
}

</mosaic_0001>

<llo_original>
// kernel: tpu_custom_call.1
$region0: #{tpu_custom_call.1}
  #allocation0 [shape = 'u32[]', space=smem, size = 0x4, offset = 0x4, fixed_abs, tag = 'smem constant byte address 0x4 - core index']
  #allocation1 [shape = 'u32[144,128]{1,0:T(1,128)}', space=vmem, size = 0x12000, scoped, tag = 'internal scratch']
  #allocation2 [shape = 'f32[1]{0:T(128)S(6)}', space=smem, size = 0x200, scoped, tag = 'scoped memory for tpu_custom_call.1']
  %s0 = inlined_call_operand.hbm [shape: f32[2,4,256], index: 0, kind: input, shape index: {}]
  %s1 = inlined_call_operand.vmem [shape: f32[4,1], index: 1, kind: input, shape index: {}]
  %s2 = inlined_call_operand.<no memory space> [shape: f32[1], index: 2, kind: input, shape index: {}]
  %s3 = inlined_call_operand.hbm [shape: f32[2,1,256], index: 3, kind: output, shape index: {}]
  %s4 = sld [smem:[#allocation0]]
  $region49: #{tpu_custom_call.1} parent=0
    _
  %s6 = ssub.s32 1, %s4
  %s7 = scalar_select 0, %s6, %s4
  %8 = sst [smem:[#allocation2]] %s2
  $region1: #{tpu_custom_call.1} parent=0
    #allocation3 [shape = 'u8[8192]{0}', space=vmem, size = 0x2000, scoped, tag = 'input window, operand 0']
    #allocation4 [shape = 's32[2]{0}', space=sflag, size = 0x8, scoped, tag = 'scoped memory for tpu_custom_call.1']
    #allocation5 [shape = 's32[2]{0}', space=sflag, size = 0x8, scoped, tag = 'scoped memory for tpu_custom_call.1']
    #allocation6 [shape = 'u8[2048]{0}', space=vmem, size = 0x800, scoped, tag = 'output window, operand 0']
    %9 = vsyncpa [#allocation4], 0
    %s10 = scalar_lea.sflag [#allocation4], 1
    %11 = vsyncpa %s10, 0
    %12 = vsyncpa [#allocation5], 0
    %s13 = scalar_lea.sflag [#allocation5], 1
    %14 = vsyncpa %s13, 0
    loop: start=0, step=1, limit=4
    $region2: #{tpu_custom_call.1} parent=1 // loop_pre_header
      _
    $region3: #{tpu_custom_call.1} parent=1 // loop_header
      %s16 = sphi 0, %s20
      %p17 = scmp.ge.s32.totalorder %s16, 4
      %s26 = sphi 0, %s28
      %s29 = sphi 0, %s26
      %s30 = sphi 0, %s29
      %s46 = sphi 0, %s30
      %s50 = sphi 0, %s50
      %s52 = sphi 0, %s50
      %s53 = sphi 0, %s52
      %s67 = sphi 0, %s53
      %s71 = sphi 0, %s71
      %s73 = sphi 0, %s71
      %s74 = sphi 0, %s73
      %s88 = sphi 0, %s74
      %s94 = sphi 0, %s96
      %s97 = sphi 0, %s94
      %s98 = sphi 0, %s97
      %s114 = sphi 0, %s98
    $region4: #{tpu_custom_call.1} parent=1 // loop_header_branch
      %19 = sbr.rel (%p17) target = $region8
    $region5: #{tpu_custom_call.1} parent=1 // loop_body
      %s21 = ssub.s32 %s16, 1
      %s22 = ssub.s32 %s16, 2
      %s23 = sadd.s32 %s16, 1
      %s24 = ssub.s32 %s16, %s23
      %p25 = scmp.eq.s32.totalorder %s24, 0
      %s27 = sadd.s32 %s26, 1
      %s28 = scalar_select %p25, %s26, %s27
      %p31 = pneg %p25
      %p32 = scmp.eq.s32.totalorder %s16, 1
      %p33 = por %p31, %p32
      %p34 = scmp.ne.s32.totalorder %s26, %s29
      %p35 = scmp.eq.s32.totalorder %s16, 0
      %p36 = por %p34, %p35
      %p37 = scmp.ne.s32.totalorder %s26, %s29
      %p38 = scmp.eq.s32.totalorder %s21, 1
      %p39 = por %p37, %p38
      %p40 = scmp.ne.s32.totalorder %s29, %s30
      %p41 = scmp.eq.s32.totalorder %s21, 0
      %p42 = por %p40, %p41
      %p43 = scmp.ne.s32.totalorder %s29, %s30
      %p44 = scmp.eq.s32.totalorder %s22, 1
      %p45 = por %p43, %p44
      %p47 = scmp.ne.s32.totalorder %s30, %s46
      %p48 = scmp.eq.s32.totalorder %s22, 0
      %p49 = por %p47, %p48
      %s51 = sadd.s32 %s50, 1
      %p54 = scmp.eq.s32.totalorder %s16, 1
      %p55 = scmp.ne.s32.totalorder %s50, %s52
      %p56 = scmp.eq.s32.totalorder %s16, 0
      %p57 = por %p55, %p56
      %p58 = scmp.ne.s32.totalorder %s50, %s52
      %p59 = scmp.eq.s32.totalorder %s21, 1
      %p60 = por %p58, %p59
      %p61 = scmp.ne.s32.totalorder %s52, %s53
      %p62 = scmp.eq.s32.totalorder %s21, 0
      %p63 = por %p61, %p62
      %p64 = scmp.ne.s32.totalorder %s52, %s53
      %p65 = scmp.eq.s32.totalorder %s22, 1
      %p66 = por %p64, %p65
      %p68 = scmp.ne.s32.totalorder %s53, %s67
      %p69 = scmp.eq.s32.totalorder %s22, 0
      %p70 = por %p68, %p69
      %s72 = sadd.s32 %s71, 1
      %p75 = scmp.eq.s32.totalorder %s16, 1
      %p76 = scmp.ne.s32.totalorder %s71, %s73
      %p77 = scmp.eq.s32.totalorder %s16, 0
      %p78 = por %p76, %p77
      %p79 = scmp.ne.s32.totalorder %s71, %s73
      %p80 = scmp.eq.s32.totalorder %s21, 1
      %p81 = por %p79, %p80
      %p82 = scmp.ne.s32.totalorder %s73, %s74
      %p83 = scmp.eq.s32.totalorder %s21, 0
      %p84 = por %p82, %p83
      %p85 = scmp.ne.s32.totalorder %s73, %s74
      %p86 = scmp.eq.s32.totalorder %s22, 1
      %p87 = por %p85, %p86
      %p89 = scmp.ne.s32.totalorder %s74, %s88
      %p90 = scmp.eq.s32.totalorder %s22, 0
      %p91 = por %p89, %p90
      %s92 = ssub.s32 %s16, %s23
      %p93 = scmp.eq.s32.totalorder %s92, 0
      %s95 = sadd.s32 %s94, 1
      %s96 = scalar_select %p93, %s94, %s95
      %p99 = pneg %p93
      %p100 = scmp.eq.s32.totalorder %s16, 1
      %p101 = por %p99, %p100
      %p102 = scmp.ne.s32.totalorder %s94, %s97
      %p103 = scmp.eq.s32.totalorder %s16, 0
      %p104 = por %p102, %p103
      %p105 = scmp.ne.s32.totalorder %s94, %s97
      %p106 = scmp.eq.s32.totalorder %s21, 1
      %p107 = por %p105, %p106
      %p108 = scmp.ne.s32.totalorder %s97, %s98
      %p109 = scmp.eq.s32.totalorder %s21, 0
      %p110 = por %p108, %p109
      %p111 = scmp.ne.s32.totalorder %s97, %s98
      %p112 = scmp.eq.s32.totalorder %s22, 1
      %p113 = por %p111, %p112
      %p115 = scmp.ne.s32.totalorder %s98, %s114
      %p116 = scmp.eq.s32.totalorder %s22, 0
      %p117 = por %p115, %p116
      %p118 = scmp.le.s32.totalorder 1, %s16
      %p119 = scmp.lt.s32.totalorder %s16, 3
      %p120 = pnand %p118, %p119
      %p121 = pneg %p120
      // Predicated region
      $region9: #{tpu_custom_call.1} parent=5 // pred_check
        _
      $region10: #{tpu_custom_call.1} parent=5 // pred_check_branch
        %123 = sbr.rel (%p120) target = $region12
      $region11: #{tpu_custom_call.1} parent=5 // pred_region
        %s124 = ssub.s32 %s16, 1
        // Predicated region
        $region13: #{tpu_custom_call.1} parent=11 // pred_check
          %p125 = pneg %p63
        $region14: #{tpu_custom_call.1} parent=11 // pred_check_branch
          %127 = sbr.rel (%p125) target = $region16
        $region15: #{tpu_custom_call.1} parent=11 // pred_region
          _
        $region16: #{tpu_custom_call.1} parent=11 // pred_fallthru
          _
        // Predicated region
        $region17: #{tpu_custom_call.1} parent=11 // pred_check
          %p128 = pneg %p84
        $region18: #{tpu_custom_call.1} parent=11 // pred_check_branch
          %130 = sbr.rel (%p128) target = $region20
        $region19: #{tpu_custom_call.1} parent=11 // pred_region
          _
        $region20: #{tpu_custom_call.1} parent=11 // pred_fallthru
          _
      $region12: #{tpu_custom_call.1} parent=5 // pred_fallthru
        _
      %p131 = scmp.lt.s32.totalorder %s16, 2
      // Predicated region
      $region21: #{tpu_custom_call.1} parent=5 // pred_check
        %p132 = pneg %p131
      $region22: #{tpu_custom_call.1} parent=5 // pred_check_branch
        %134 = sbr.rel (%p132) target = $region24
      $region23: #{tpu_custom_call.1} parent=5 // pred_region
        // Predicated region
        $region25: #{tpu_custom_call.1} parent=23 // pred_check
          %p135 = pneg %p36
        $region26: #{tpu_custom_call.1} parent=23 // pred_check_branch
          %137 = sbr.rel (%p135) target = $region28
        $region27: #{tpu_custom_call.1} parent=23 // pred_region
          %s138 = sand.u32 %s26, 1
          %s139 = scalar_lea.sflag [#allocation4], %s138
          %s140 = sand.u32 %s26, 1
          %s141 = smul.addr %s140, 8
          %s142 = scalar_lea.vmem [#allocation3], %s141
          %s144 = ssub.s32 128, 128
          %145 = vsyncadd %s139, %s144
          %s146 = smul.addr %s16, 2
          %s147 = smul.addr %s146, 64
          %s148 = scalar_lea.hbm %s0, %s147
          %s150 = sshll.u32 %s142, 4
          %s151 = int_to_ptr.vmem [resolvable:$true] %s150
          %153 = dma.hbm_to_vmem [thread:$0]  %s148, 128, %s151, %s139
        $region28: #{tpu_custom_call.1} parent=23 // pred_fallthru
          _
      $region24: #{tpu_custom_call.1} parent=5 // pred_fallthru
        _
      %p154 = scmp.le.s32.totalorder 1, %s16
      %p155 = scmp.lt.s32.totalorder %s16, 3
      %p156 = pnand %p154, %p155
      %p157 = pneg %p156
      // Predicated region
      $region29: #{tpu_custom_call.1} parent=5 // pred_check
        _
      $region30: #{tpu_custom_call.1} parent=5 // pred_check_branch
        %159 = sbr.rel (%p156) target = $region32
      $region31: #{tpu_custom_call.1} parent=5 // pred_region
        %s160 = ssub.s32 %s16, 1
        %s161 = sand.u32 %s29, 1
        %s162 = scalar_lea.sflag [#allocation4], %s161
        %s163 = sand.u32 %s29, 1
        %s164 = smul.addr %s163, 8
        %s165 = scalar_lea.vmem [#allocation3], %s164
        // Predicated region
        $region33: #{tpu_custom_call.1} parent=31 // pred_check
          %p166 = pneg %p42
        $region34: #{tpu_custom_call.1} parent=31 // pred_check_branch
          %168 = sbr.rel (%p166) target = $region36
        $region35: #{tpu_custom_call.1} parent=31 // pred_region
          %169 = dma.done %s162, 128
        $region36: #{tpu_custom_call.1} parent=31 // pred_fallthru
          _
        %s170 = sand.u32 %s29, 1
        %s171 = scalar_lea.sflag [#allocation4], %s170
        %s172 = sand.u32 %s29, 1
        %s173 = smul.addr %s172, 8
        %s174 = scalar_lea.vmem [#allocation3], %s173
        %p175 = pneg %p42
        %p176 = pneg %p39
        %p177 = pneg %p63
        %p178 = pneg %p60
        %p179 = pneg %p84
        %p180 = pneg %p81
        %p181 = pneg %p110
        %p182 = pneg %p107
        %s183 = sand.u32 %s97, 1
        %s184 = scalar_lea.sflag [#allocation5], %s183
        %s185 = sand.u32 %s97, 1
        %s186 = smul.addr %s185, 2
        %s187 = scalar_lea.vmem [#allocation6], %s186
        %v188 = vld [vmem:[%s165] sm:$0xff]
        %v189 = vld [vmem:[%s1] sm:$0xf]
        %191 = vset.pattern.permute.xlu0 0
        %192 = vperm.xlu0 %191, %v189
        %v193 = vpop.permute.xlu0 %192
        %v195 = vunpack.c.l.s4 839922192
        %v196 = vunpack.c.0.s8 %v195
        %v197 = vlaneseq
        %v198 = vshrl.u32 %v197, 7
        %v199 = vsub.s32 %v196, %v198
        %v200 = vrot.slane %v193, %v199
        %v202 = vmul.f32 %v188, %v200
        %v204 = vcombine.high %v202, %v202
        %vm206 = vcmask 1043456
        %v207 = vsel %vm206, %v202, 0.0
        %v208 = vrot.slane %v207, 4
        %v209 = vadd.f32 %v207, %v208
        %v210 = vrot.slane %v209, 2
        %v211 = vadd.f32 %v209, %v210
        %v212 = vrot.slane %v211, 1
        %v213 = vadd.f32 %v211, %v212
        %v214 = vsel %vm206, %v204, 0.0
        %v215 = vrot.slane %v214, 4
        %v216 = vadd.f32 %v214, %v215
        %v217 = vrot.slane %v216, 2
        %v218 = vadd.f32 %v216, %v217
        %v219 = vrot.slane %v218, 1
        %v220 = vadd.f32 %v218, %v219
        %s221 = sld [smem:[#allocation2]]
        %v222 = vstv %s221
        %v223 = vadd.f32 %v213, %v222
        %v224 = vadd.f32 %v220, %v222
        %v225 = vand.u32 2147483647, %v223
        %v226 = vand.u32 2147483647, %v224
        %v229 = vcombine.low %v225, %v226
        %v231 = vunpack.c.l.s4 1966171168
        %v232 = vunpack.c.0.s8 %v231
        %v233 = vlaneseq
        %v234 = vshrl.u32 %v233, 7
        %v235 = vsub.s32 %v232, %v234
        %v236 = vrot.slane %v229, %v235
        %v238 = vunpack.c.l.s4 1966171168
        %v239 = vunpack.c.0.s8 %v238
        %v240 = vlaneseq
        %v241 = vshrl.u32 %v240, 7
        %v242 = vsub.s32 %v239, %v241
        %v243 = vrot.slane %v236, %v242
        %v245 = vlaneseq
        %vm246 = vcmp.ge.s32.totalorder %v245, 0
        %vm247 = vcmp.lt.s32.totalorder %v245, 256
        %vm248 = vmand %vm246, %vm247
        %249 = vst.msk [vmem:[%s187] sm:$0x3] %vm248, %v243
        %s250 = sand.u32 %s97, 1
        %s251 = scalar_lea.sflag [#allocation5], %s250
        %s252 = sand.u32 %s97, 1
        %s253 = smul.addr %s252, 2
        %s254 = scalar_lea.vmem [#allocation6], %s253
        // Predicated region
        $region37: #{tpu_custom_call.1} parent=31 // pred_check
          %p255 = pneg %p107
        $region38: #{tpu_custom_call.1} parent=31 // pred_check_branch
          %257 = sbr.rel (%p255) target = $region40
        $region39: #{tpu_custom_call.1} parent=31 // pred_region
          %s259 = ssub.s32 32, 32
          %260 = vsyncadd %s251, %s259
          %s261 = smul.addr %s21, 2
          %s262 = smul.addr %s261, 16
          %s263 = scalar_lea.hbm %s3, %s262
          %s265 = sshll.u32 %s254, 4
          %s266 = int_to_ptr.vmem [resolvable:$true] %s265
          %268 = dma.vmem_to_hbm [thread:$0]  %s266, 32, %s263, %s251
        $region40: #{tpu_custom_call.1} parent=31 // pred_fallthru
          _
      $region32: #{tpu_custom_call.1} parent=5 // pred_fallthru
        _
      %p269 = scmp.le.s32.totalorder 2, %s16
      // Predicated region
      $region41: #{tpu_custom_call.1} parent=5 // pred_check
        %p270 = pneg %p269
      $region42: #{tpu_custom_call.1} parent=5 // pred_check_branch
        %272 = sbr.rel (%p270) target = $region44
      $region43: #{tpu_custom_call.1} parent=5 // pred_region
        %s273 = ssub.s32 %s16, 2
        // Predicated region
        $region45: #{tpu_custom_call.1} parent=43 // pred_check
          %p274 = pneg %p113
        $region46: #{tpu_custom_call.1} parent=43 // pred_check_branch
          %276 = sbr.rel (%p274) target = $region48
        $region47: #{tpu_custom_call.1} parent=43 // pred_region
          %s277 = sand.u32 %s98, 1
          %s278 = scalar_lea.sflag [#allocation5], %s277
          %s279 = sand.u32 %s98, 1
          %s280 = smul.addr %s279, 2
          %s281 = scalar_lea.vmem [#allocation6], %s280
          %282 = dma.done %s278, 32
        $region48: #{tpu_custom_call.1} parent=43 // pred_fallthru
          _
      $region44: #{tpu_custom_call.1} parent=5 // pred_fallthru
        _
    $region6: #{tpu_custom_call.1} parent=1 // loop_footer
      %s20 = sadd.s32 1, %s16
    $region7: #{tpu_custom_call.1} parent=1 // loop_footer_branch
      %15 = sbr.rel target = $region3
    $region8: #{tpu_custom_call.1} parent=1 // loop_exit
      _
    %283 = vsyncpa [#allocation4], 1
    %s284 = scalar_lea.sflag [#allocation4], 1
    %285 = vsyncpa %s284, 1
    %286 = vsyncpa [#allocation5], 1
    %s287 = scalar_lea.sflag [#allocation5], 1
    %288 = vsyncpa %s287, 1

</llo_original>
